<compile_context>
chip_gen: v7x
topology: tpu7x:2x2x1
jax: 0.10.0
libtpu: 0.0.40
codegen_flags: <defaults>
</compile_context>

<pallas_src>
import math

import jax
import jax.numpy as jnp
from jax.experimental import pallas as pl
from jax.experimental.pallas import tpu as pltpu


def _fused_kernel(x_ref, w_ref, b_ref, o_ref):
    # One MXU push per batch tile; f32 accumulate, f32 bias add (VPU), f32 store.
    acc = jnp.dot(x_ref[...], w_ref[...], preferred_element_type=jnp.float32)
    o_ref[...] = (acc + b_ref[...]).astype(o_ref.dtype)


def _fold_params(params, hidden_dim, param_dtype):
    """Constant-fold action_proj -> Wv -> attn.out_proj -> output_proj into a
    single (action_dim, repr_dim) weight and (1, repr_dim) bias (trace-time,
    f32, outside the kernel)."""
    f32 = jnp.float32
    wa = jnp.asarray(params["action_proj_w"], f32)            # (H, A)
    ba = jnp.asarray(params["action_proj_b"], f32)            # (H,)
    wqkv = jnp.asarray(params["attn_in_proj_w"], f32)         # (3H, H)
    bqkv = jnp.asarray(params["attn_in_proj_b"], f32)         # (3H,)
    wv = wqkv[2 * hidden_dim:]                                 # (H, H)
    bv = bqkv[2 * hidden_dim:]                                 # (H,)
    wo = jnp.asarray(params["attn_out_proj_w"], f32)          # (H, H)
    bo = jnp.asarray(params["attn_out_proj_b"], f32)          # (H,)
    wout = jnp.asarray(params["output_proj_w"], f32)          # (R, H)
    bout = jnp.asarray(params["output_proj_b"], f32)          # (R,)

    # x @ Wa.T @ Wv.T @ Wo.T @ Wout.T  ==  x @ (Wout @ Wo @ Wv @ Wa).T
    w_fused = (wout @ wo @ wv @ wa).T                          # (A, R)
    b_fused = ((ba @ wv.T + bv) @ wo.T + bo) @ wout.T + bout   # (R,)
    return w_fused.astype(param_dtype), b_fused.reshape(1, -1)  # bias stays f32


def _round_up(x, m):
    return ((x + m - 1) // m) * m


def attentive_predictor(repr_x, action_x, params, *, num_heads=4,
                        param_dtype=jnp.float32, tile_b=4096,
                        vmem_tile_budget=8 * 1024 * 1024):
    """Forward pass of AttentivePredictor.

    `repr_x` / `num_heads` are accepted for API parity with the PyTorch module,
    but with a single key the softmax is identically 1 so neither affects the
    output; they are not sent to the TPU kernel at all.
    """
    B = action_x.shape[0]
    assert repr_x.shape[0] == B
    hidden_dim = params["repr_proj_w"].shape[0]
    repr_dim = params["output_proj_w"].shape[0]
    action_dim = params["action_proj_w"].shape[1]
    del repr_x, num_heads  # dead under seq_len == 1 semantics

    w_fused, b_fused = _fold_params(params, hidden_dim, param_dtype)
    x = jnp.asarray(action_x, param_dtype)
    x_itemsize = jnp.dtype(param_dtype).itemsize

    # Batch tiling: sublane-aligned (multiple of 8) tiles.  Large tiles
    # amortize the ~0.35 us per-grid-step overhead (this kernel is memory /
    # overhead bound), capped so the double-buffered activation+output tiles
    # stay inside a modest VMEM budget on every chip (incl. v7x's 64 MiB).
    bytes_per_row = action_dim * x_itemsize + repr_dim * 4
    max_rows = max(8, (vmem_tile_budget // (2 * bytes_per_row)) // 8 * 8)
    padded_b = _round_up(B, 8)
    tb = min(padded_b, _round_up(min(tile_b, max_rows), 8))
    padded_b = _round_up(padded_b, tb)
    if padded_b != B:
        x = jnp.pad(x, ((0, padded_b - B), (0, 0)))
    grid = (padded_b // tb,)

    out = pl.pallas_call(
        _fused_kernel,
        out_shape=jax.ShapeDtypeStruct((padded_b, repr_dim), jnp.float32),
        grid_spec=pltpu.PrefetchScalarGridSpec(
            num_scalar_prefetch=0,
            grid=grid,
            in_specs=[
                pl.BlockSpec((tb, action_dim), lambda i: (i, 0)),        # activations (pipelined)
                pl.BlockSpec((action_dim, repr_dim), lambda i: (0, 0)),  # fused weight (VMEM-resident)
                pl.BlockSpec((1, repr_dim), lambda i: (0, 0)),           # fused bias (f32)
            ],
            out_specs=pl.BlockSpec((tb, repr_dim), lambda i: (i, 0)),
        ),
        compiler_params=pltpu.CompilerParams(
            dimension_semantics=("parallel",),       # shards grid across v7x's 2 TCs
            vmem_limit_bytes=32 * 1024 * 1024,       # safe on v7x's 64 MiB VMEM
        ),
        cost_estimate=pl.CostEstimate(
            flops=2 * padded_b * action_dim * repr_dim,
            transcendentals=0,
            bytes_accessed=(padded_b * (action_dim * x_itemsize + repr_dim * 4)
                            + action_dim * repr_dim * x_itemsize + repr_dim * 4),
        ),
    )(x, w_fused, b_fused)

    # TODO(synk): repr_dim=32 (<128 lanes) keeps the epilogue on masked stores;
    # lane-packing multiple problem instances would give lane-dense output but
    # would triple HBM writeback bytes for a single-module forward, so skipped.
    return out[:B]


def _reference(repr_x, action_x, params, *, num_heads=4):
    """Pure-JAX reference reproducing the PyTorch forward exactly."""
    hidden_dim = params["repr_proj_w"].shape[0]
    rp = repr_x @ params["repr_proj_w"].T + params["repr_proj_b"]
    ap = action_x @ params["action_proj_w"].T + params["action_proj_b"]
    wqkv, bqkv = params["attn_in_proj_w"], params["attn_in_proj_b"]
    q = rp @ wqkv[:hidden_dim].T + bqkv[:hidden_dim]
    k = ap @ wqkv[hidden_dim:2 * hidden_dim].T + bqkv[hidden_dim:2 * hidden_dim]
    v = ap @ wqkv[2 * hidden_dim:].T + bqkv[2 * hidden_dim:]
    B = q.shape[0]
    d = hidden_dim // num_heads
    qh = q.reshape(B, num_heads, d)
    kh = k.reshape(B, num_heads, d)
    vh = v.reshape(B, num_heads, d)
    scores = jnp.sum(qh * kh, axis=-1, keepdims=True) / math.sqrt(d)  # single key
    probs = jax.nn.softmax(scores, axis=-1)                           # == 1
    attended = (probs * vh).reshape(B, hidden_dim)
    attn_out = attended @ params["attn_out_proj_w"].T + params["attn_out_proj_b"]
    return attn_out @ params["output_proj_w"].T + params["output_proj_b"]


def _init_params(key, repr_dim, action_dim, hidden_dim):
    keys = jax.random.split(key, 10)
    s = 0.1
    return {
        "repr_proj_w":      s * jax.random.normal(keys[0], (hidden_dim, repr_dim), jnp.float32),
        "repr_proj_b":      s * jax.random.normal(keys[1], (hidden_dim,), jnp.float32),
        "action_proj_w":    s * jax.random.normal(keys[2], (hidden_dim, action_dim), jnp.float32),
        "action_proj_b":    s * jax.random.normal(keys[3], (hidden_dim,), jnp.float32),
        "attn_in_proj_w":   s * jax.random.normal(keys[4], (3 * hidden_dim, hidden_dim), jnp.float32),
        "attn_in_proj_b":   s * jax.random.normal(keys[5], (3 * hidden_dim,), jnp.float32),
        "attn_out_proj_w":  s * jax.random.normal(keys[6], (hidden_dim, hidden_dim), jnp.float32),
        "attn_out_proj_b":  s * jax.random.normal(keys[7], (hidden_dim,), jnp.float32),
        "output_proj_w":    s * jax.random.normal(keys[8], (repr_dim, hidden_dim), jnp.float32),
        "output_proj_b":    s * jax.random.normal(keys[9], (repr_dim,), jnp.float32),
    }


if __name__ == "__main__":
    B, repr_dim, action_dim, hidden_dim = 8, 32, 16, 32  # hidden_dim % 4 heads == 0

    key = jax.random.PRNGKey(0)
    k_repr, k_act, k_par = jax.random.split(key, 3)
    repr_x = jax.random.normal(k_repr, (B, repr_dim), jnp.float32)
    action_x = jax.random.normal(k_act, (B, action_dim), jnp.float32)
    params = _init_params(k_par, repr_dim, action_dim, hidden_dim)

    # f32 path (exact module semantics)
    out = jax.block_until_ready(attentive_predictor(repr_x, action_x, params))
    ref = _reference(repr_x, action_x, params)
    assert out.shape == (B, repr_dim)
    assert jnp.allclose(out, ref, rtol=1e-4, atol=1e-4), "f32 mismatch vs reference"

    # larger, non-multiple-of-tile batch exercises the grid + padding path
    B2 = 1000
    action_x2 = jax.random.normal(jax.random.fold_in(k_act, 1), (B2, action_dim), jnp.float32)
    repr_x2 = jnp.zeros((B2, repr_dim), jnp.float32)
    out2 = jax.block_until_ready(
        attentive_predictor(repr_x2, action_x2, params, tile_b=256))
    ref2 = _reference(repr_x2, action_x2, params)
    assert out2.shape == (B2, repr_dim)
    assert jnp.allclose(out2, ref2, rtol=1e-4, atol=1e-4), "gridded mismatch vs reference"

    # bf16 operands (halved DMA bytes on v6e/v7x), f32 accumulate -> looser tol
    out_bf16 = jax.block_until_ready(
        attentive_predictor(repr_x, action_x, params, param_dtype=jnp.bfloat16))
    assert out_bf16.shape == (B, repr_dim)
    assert jnp.allclose(out_bf16, ref, rtol=3e-2, atol=3e-2), "bf16 mismatch vs reference"

    print("KERNEL_OK")
</pallas_src>

<mosaic_0001>
module attributes {stable_mosaic.version = 11 : i64} {
  func.func @_fused_kernel(%arg0: i32, %arg1: memref<8x16xf32, #tpu.memory_space<vmem>>, %arg2: memref<16x32xf32, #tpu.memory_space<vmem>>, %arg3: memref<1x32xf32, #tpu.memory_space<vmem>>, %arg4: memref<8x32xf32, #tpu.memory_space<vmem>>) attributes {dimension_semantics = [#tpu.dimension_semantics<parallel>], iteration_bounds = array<i64: 1>, scalar_prefetch = 0 : i64, scratch_operands = 0 : i64, tpu.core_type = #tpu.core_type<tc>, window_params = [{transform_indices = @transform_0, window_bounds = array<i64: 8, 16>}, {pipeline_mode = #tpu.pipeline_mode<synchronous>, transform_indices = @transform_1, window_bounds = array<i64: 16, 32>}, {pipeline_mode = #tpu.pipeline_mode<synchronous>, transform_indices = @transform_2, window_bounds = array<i64: 1, 32>}, {transform_indices = @transform_3, window_bounds = array<i64: 8, 32>}]} {
    %c0 = arith.constant 0 : index
    %c0_0 = arith.constant 0 : index
    %0 = vector.load %arg1[%c0, %c0_0] : memref<8x16xf32, #tpu.memory_space<vmem>>, vector<8x16xf32>
    %c0_1 = arith.constant 0 : index
    %c0_2 = arith.constant 0 : index
    %1 = vector.load %arg2[%c0_1, %c0_2] : memref<16x32xf32, #tpu.memory_space<vmem>>, vector<16x32xf32>
    %cst = arith.constant dense<0.000000e+00> : vector<8x32xf32>
    %2 = tpu.matmul %0, %1, %cst {dimension_numbers = #tpu.dot_dimension_numbers<[1], [0], [0], [1], [0, 0, 1, 1], [], []>} : vector<8x16xf32>, vector<16x32xf32>, vector<8x32xf32> -> vector<8x32xf32>
    %c0_3 = arith.constant 0 : index
    %c0_4 = arith.constant 0 : index
    %3 = vector.load %arg3[%c0_3, %c0_4] : memref<1x32xf32, #tpu.memory_space<vmem>>, vector<1x32xf32>
    %4 = vector.broadcast %3 : vector<1x32xf32> to vector<8x32xf32>
    %5 = arith.addf %2, %4 : vector<8x32xf32>
    %c0_5 = arith.constant 0 : index
    %c0_6 = arith.constant 0 : index
    %6 = vector.load %arg4[%c0_5, %c0_6] : memref<8x32xf32, #tpu.memory_space<vmem>>, vector<8x32xf32>
    tpu.vector_store %arg4[%c0_5, %c0_6], %5 {strides = array<i32>} : memref<8x32xf32, #tpu.memory_space<vmem>>, vector<8x32xf32>,
    return
  }
  func.func @transform_0(%arg0: i32) -> (i32, i32) {
    %c0_i32 = arith.constant 0 : i32
    %c0_i32_0 = arith.constant 0 : i32
    return %arg0, %c0_i32 : i32, i32
  }
  func.func @transform_1(%arg0: i32) -> (i32, i32) {
    %c0_i32 = arith.constant 0 : i32
    %c0_i32_0 = arith.constant 0 : i32
    %c0_i32_1 = arith.constant 0 : i32
    return %c0_i32, %c0_i32_0 : i32, i32
  }
  func.func @transform_2(%arg0: i32) -> (i32, i32) {
    %c0_i32 = arith.constant 0 : i32
    %c0_i32_0 = arith.constant 0 : i32
    %c0_i32_1 = arith.constant 0 : i32
    return %c0_i32, %c0_i32_0 : i32, i32
  }
  func.func @transform_3(%arg0: i32) -> (i32, i32) {
    %c0_i32 = arith.constant 0 : i32
    %c0_i32_0 = arith.constant 0 : i32
    return %arg0, %c0_i32 : i32, i32
  }
}

</mosaic_0001>

<llo_original>
// kernel: tpu_custom_call.1
$region0: #{tpu_custom_call.1}
  #allocation0 [shape = 'u32[]', space=smem, size = 0x4, offset = 0x4, fixed_abs, tag = 'smem constant byte address 0x4 - core index']
  #allocation1 [shape = 'u32[144,128]{1,0:T(1,128)}', space=vmem, size = 0x12000, scoped, tag = 'internal scratch']
  %s0 = inlined_call_operand.hbm [shape: f32[8,16], index: 0, kind: input, shape index: {}]
  %s1 = inlined_call_operand.hbm [shape: f32[16,32], index: 1, kind: input, shape index: {}]
  %s2 = inlined_call_operand.vmem [shape: f32[1,32], index: 2, kind: input, shape index: {}]
  %s3 = inlined_call_operand.hbm [shape: f32[8,32], index: 3, kind: output, shape index: {}]
  %s4 = sld [smem:[#allocation0]]
  $region30: #{tpu_custom_call.1} parent=0
    _
  %s6 = ssub.s32 1, %s4
  %s7 = scalar_select 0, %s6, %s4
  $region1: #{tpu_custom_call.1} parent=0
    #allocation2 [shape = 'u8[4096]{0}', space=vmem, size = 0x1000, scoped, tag = 'input window, operand 0, single buffered']
    #allocation3 [shape = 's32[1]{0}', space=sflag, size = 0x4, scoped, tag = 'scoped memory for tpu_custom_call.1']
    #allocation4 [shape = 's32[1]{0}', space=sflag, size = 0x4, scoped, tag = 'scoped memory for tpu_custom_call.1']
    #allocation5 [shape = 'u8[8192]{0}', space=vmem, size = 0x2000, scoped, tag = 'input window, operand 1, single buffered']
    #allocation6 [shape = 's32[1]{0}', space=sflag, size = 0x4, scoped, tag = 'scoped memory for tpu_custom_call.1']
    #allocation7 [shape = 'u8[4096]{0}', space=vmem, size = 0x1000, scoped, tag = 'output window, operand 0, single buffered']
    %8 = vsyncpa [#allocation3], 0
    %9 = vsyncpa [#allocation6], 0
    %10 = vsyncpa [#allocation4], 0
    // Predicated region
    $region2: #{tpu_custom_call.1} parent=1 // pred_check
      _
    $region3: #{tpu_custom_call.1} parent=1 // pred_check_branch
      %12 = sbr.rel (0) target = $region5
    $region4: #{tpu_custom_call.1} parent=1 // pred_region
      %s14 = ssub.s32 128, 128
      %15 = vsyncadd [#allocation3], %s14
      %s17 = sshll.u32 [#allocation2], 4
      %s18 = int_to_ptr.vmem [resolvable:$true] %s17
      %20 = dma.hbm_to_vmem [thread:$0]  %s0, 128, %s18, [#allocation3]
    $region5: #{tpu_custom_call.1} parent=1 // pred_fallthru
      _
    // Predicated region
    $region6: #{tpu_custom_call.1} parent=1 // pred_check
      _
    $region7: #{tpu_custom_call.1} parent=1 // pred_check_branch
      %22 = sbr.rel (0) target = $region9
    $region8: #{tpu_custom_call.1} parent=1 // pred_region
      %s24 = ssub.s32 256, 256
      %25 = vsyncadd [#allocation6], %s24
      %s26 = sshll.u32 [#allocation5], 4
      %s27 = int_to_ptr.vmem [resolvable:$true] %s26
      %32 = dma.hbm_to_vmem [thread:$0]  %s1, 256, %s27, [#allocation6], 128, 128, 8
    $region9: #{tpu_custom_call.1} parent=1 // pred_fallthru
      _
    // Predicated region
    $region10: #{tpu_custom_call.1} parent=1 // pred_check
      _
    $region11: #{tpu_custom_call.1} parent=1 // pred_check_branch
      %34 = sbr.rel (0) target = $region13
    $region12: #{tpu_custom_call.1} parent=1 // pred_region
      _
    $region13: #{tpu_custom_call.1} parent=1 // pred_fallthru
      _
    // Predicated region
    $region14: #{tpu_custom_call.1} parent=1 // pred_check
      _
    $region15: #{tpu_custom_call.1} parent=1 // pred_check_branch
      %36 = sbr.rel (0) target = $region17
    $region16: #{tpu_custom_call.1} parent=1 // pred_region
      %37 = dma.done [#allocation3], 128
    $region17: #{tpu_custom_call.1} parent=1 // pred_fallthru
      _
    // Predicated region
    $region18: #{tpu_custom_call.1} parent=1 // pred_check
      _
    $region19: #{tpu_custom_call.1} parent=1 // pred_check_branch
      %39 = sbr.rel (0) target = $region21
    $region20: #{tpu_custom_call.1} parent=1 // pred_region
      %40 = dma.done [#allocation6], 256
    $region21: #{tpu_custom_call.1} parent=1 // pred_fallthru
      _
    %v41 = vld [vmem:[#allocation2] sm:$0xff]
    %v42 = vld [vmem:[#allocation5] sm:$0xff]
    %v43 = vld [vmem:[#allocation5 + $0x8] sm:$0xff]
    %v44 = vld [vmem:[%s2] sm:$0x1]
    %v46 = vlaneseq
    %v47 = vshrl.u32 %v46, 7
    %v48 = vsub.s32 0, %v47
    %v49 = vrot.slane %v44, %v48
    %vm51 = vcmask 130048
    %v53 = vsel %vm51, %v41, 0
    %55 = vmatprep.subr.mxu0 0.0
    %56 = vmatpush1.msra.mxu0 %v42
    %57 = vmatprep.subr.mxu0 0.0
    %58 = vmatpush1.msra.mxu0 %v43
    %59 = vmatprep.subr.mxu0 0.0
    %60 = vmatpush1.msra.mxu0 0.0
    %61 = vmatprep.subr.mxu0 0.0
    %62 = vmatpush1.msra.mxu0 0.0
    %63 = vmatprep.subr.mxu0 0.0
    %64 = vmatpush1.msra.mxu0 0.0
    %65 = vmatprep.subr.mxu0 0.0
    %66 = vmatpush1.msra.mxu0 0.0
    %67 = vmatprep.subr.mxu0 0.0
    %68 = vmatpush1.msra.mxu0 0.0
    %69 = vmatprep.subr.mxu0 0.0
    %70 = vmatpush1.msra.mxu0 0.0
    %71 = vmatprep.subr.mxu0 0.0
    %72 = vmatpush1.msra.mxu0 0.0
    %73 = vmatprep.subr.mxu0 0.0
    %74 = vmatpush1.msra.mxu0 0.0
    %75 = vmatprep.subr.mxu0 0.0
    %76 = vmatpush1.msra.mxu0 0.0
    %77 = vmatprep.subr.mxu0 0.0
    %78 = vmatpush1.msra.mxu0 0.0
    %79 = vmatprep.subr.mxu0 0.0
    %80 = vmatpush1.msra.mxu0 0.0
    %81 = vmatprep.subr.mxu0 0.0
    %82 = vmatpush1.msra.mxu0 0.0
    %83 = vmatprep.subr.mxu0 0.0
    %84 = vmatpush1.msra.mxu0 0.0
    %85 = vmatprep.subr.mxu0 0.0
    %86 = vmatpush1.msra.mxu0 0.0
    %87 = vmatprep.subr.mxu0 0.0
    %88 = vmatpush1.msra.mxu0 0.0
    %89 = vmatprep.subr.mxu0 0.0
    %90 = vmatpush1.msra.mxu0 0.0
    %91 = vmatprep.subr.mxu0 0.0
    %92 = vmatpush1.msra.mxu0 0.0
    %93 = vmatprep.subr.mxu0 0.0
    %94 = vmatpush1.msra.mxu0 0.0
    %95 = vmatprep.subr.mxu0 0.0
    %96 = vmatpush1.msra.mxu0 0.0
    %97 = vmatprep.subr.mxu0 0.0
    %98 = vmatpush1.msra.mxu0 0.0
    %99 = vmatprep.subr.mxu0 0.0
    %100 = vmatpush1.msra.mxu0 0.0
    %101 = vmatprep.subr.mxu0 0.0
    %102 = vmatpush1.msra.mxu0 0.0
    %103 = vmatprep.subr.mxu0 0.0
    %104 = vmatpush1.msra.mxu0 0.0
    %105 = vmatprep.subr.mxu0 0.0
    %106 = vmatpush1.msra.mxu0 0.0
    %107 = vmatprep.subr.mxu0 0.0
    %108 = vmatpush1.msra.mxu0 0.0
    %109 = vmatprep.subr.mxu0 0.0
    %110 = vmatpush1.msra.mxu0 0.0
    %111 = vmatprep.subr.mxu0 0.0
    %112 = vmatpush1.msra.mxu0 0.0
    %113 = vmatprep.subr.mxu0 0.0
    %114 = vmatpush1.msra.mxu0 0.0
    %115 = vmatprep.subr.mxu0 0.0
    %116 = vmatpush1.msra.mxu0 0.0
    %117 = vmatprep.subr.mxu0 0.0
    %118 = vmatpush1.msra.mxu0 0.0
    %119 = vmatprep.mubr.f32.mxu0 0.0
    %120 = vmatmul.mubr.f32.gmra.mrb[0].mxu0 %v53
    %v121 = vpop.f32.mrb[0].mxu0
    %v122 = vadd.f32 %v49, %v121
    %v123 = vpop.f32.mrb[0].mxu0
    %124 = vdwg.mxu0
    %vm125 = vcmask 261120
    %126 = vst.msk [vmem:[#allocation7] sm:$0xff] %vm125, %v122
    // Predicated region
    $region22: #{tpu_custom_call.1} parent=1 // pred_check
      _
    $region23: #{tpu_custom_call.1} parent=1 // pred_check_branch
      %128 = sbr.rel (0) target = $region25
    $region24: #{tpu_custom_call.1} parent=1 // pred_region
      %s130 = ssub.s32 128, 128
      %131 = vsyncadd [#allocation4], %s130
      %s133 = sshll.u32 [#allocation7], 4
      %s134 = int_to_ptr.vmem [resolvable:$true] %s133
      %136 = dma.vmem_to_hbm [thread:$0]  %s134, 128, %s3, [#allocation4]
    $region25: #{tpu_custom_call.1} parent=1 // pred_fallthru
      _
    // Predicated region
    $region26: #{tpu_custom_call.1} parent=1 // pred_check
      _
    $region27: #{tpu_custom_call.1} parent=1 // pred_check_branch
      %138 = sbr.rel (0) target = $region29
    $region28: #{tpu_custom_call.1} parent=1 // pred_region
      %139 = dma.done [#allocation4], 128
    $region29: #{tpu_custom_call.1} parent=1 // pred_fallthru
      _
    %140 = vsyncpa [#allocation3], 1
    %141 = vsyncpa [#allocation6], 1
    %142 = vsyncpa [#allocation4], 1

</llo_original>
